<compile_context>
chip_gen: v7x
topology: tpu7x:2x2x1
jax: 0.10.0
libtpu: 0.0.40
codegen_flags: <defaults>
</compile_context>

<pallas_src>
import functools

import jax
import jax.numpy as jnp
from jax import lax
from jax.experimental import pallas as pl
from jax.experimental.pallas import tpu as pltpu


def _focal_loss_kernel(pred_ref, true_ref, ce_ref, foc_ref, *,
                       gamma, alpha, hw_valid, t_sub, needs_mask):
    """One (C, t_sub, 128) spatial tile of one batch element.

    pred_ref/true_ref: (1, C, t_sub, 128) blocks (classes on the slab axis,
                       spatial positions dense on sublane/lane).
    ce_ref/foc_ref:    (1, 8, 128) per-batch partial-sum accumulators; the
                       output block is resident across the reduction grid axis.
    """
    j = pl.program_id(1)

    @pl.when(j == 0)
    def _():
        ce_ref[...] = jnp.zeros_like(ce_ref)
        foc_ref[...] = jnp.zeros_like(foc_ref)

    x = pred_ref[0].astype(jnp.float32)   # (C, T, 128) logits
    t = true_ref[0].astype(jnp.float32)   # (C, T, 128) probability targets

    # log_softmax over the class axis (axis 0): elementwise across vreg slabs,
    # no cross-lane/XLU work.
    m = jnp.max(x, axis=0, keepdims=True)
    e = jnp.exp(x - m)
    lse = jnp.log(jnp.sum(e, axis=0, keepdims=True)) + m
    logp = x - lse

    # per-pixel CE with probability targets: -sum_c t*logp  -> (T, 128)
    ce_pix = jnp.sum(-t * logp, axis=0)

    # focal factor summed over classes: alpha_f * |t - logp|**gamma -> (T, 128)
    alpha_f = t * alpha + (1.0 - t) * (1.0 - alpha)
    d = jnp.abs(t - logp)
    if float(gamma) == int(gamma) and gamma >= 0:
        g = int(gamma)                      # integer gamma: VALU multiplies only
        mod = jnp.ones_like(d) if g == 0 else d
        for _ in range(g - 1):
            mod = mod * d
    else:
        mod = jnp.power(d, float(gamma))    # non-integer gamma: EUP fallback
    foc_pix = jnp.sum(alpha_f * mod, axis=0)

    if needs_mask:
        # zero out zero-padded spatial positions (flat position >= H*W)
        pos = (j * (t_sub * 128)
               + lax.broadcasted_iota(jnp.int32, (t_sub, 128), 0) * 128
               + lax.broadcasted_iota(jnp.int32, (t_sub, 128), 1))
        valid = pos < hw_valid
        ce_pix = jnp.where(valid, ce_pix, 0.0)
        foc_pix = jnp.where(valid, foc_pix, 0.0)

    # Accumulate into vreg-shaped (8,128) partials. The reshape only regroups
    # whole (8,128) vregs (free) and the reduction is plain VALU adds; no
    # cross-lane XLU reduce or masked scalar store inside the loop.
    ce_ref[...] = ce_ref[...] + ce_pix.reshape(1, -1, 8, 128).sum(axis=1)
    foc_ref[...] = foc_ref[...] + foc_pix.reshape(1, -1, 8, 128).sum(axis=1)


def focal_loss(pred_nchw, true_nchw, gamma=2, alpha=0.25,
               tile_bytes=2 << 20, max_rows_per_tile=4096):
    """FocalLoss forward. pred/true: float arrays of shape (N, C, H, W)."""
    N, C, H, W = pred_nchw.shape
    HW = H * W

    # Free reshape (no transpose), keep native dtype: casting happens in-kernel
    # after the DMA so HBM traffic stays at the input dtype width.
    pred3 = pred_nchw.reshape(N, C, HW)
    true3 = true_nchw.reshape(N, C, HW)

    # Spatial positions go dense on (sublane, lane): target layout (N, C, rows, 128).
    rows = (HW + 127) // 128
    rows8 = ((rows + 7) // 8) * 8

    # Rows of 128 lanes per grid step: aim for ~tile_bytes of input per block,
    # multiple of 8, capped by the (padded) number of rows available.
    itemsize = jnp.dtype(pred_nchw.dtype).itemsize
    t_sub = max(8, tile_bytes // (C * 128 * itemsize))
    t_sub = min((int(t_sub) // 8) * 8, max_rows_per_tile, rows8)
    rows_pad = ((rows8 + t_sub - 1) // t_sub) * t_sub
    hw_pad = rows_pad * 128
    needs_mask = hw_pad != HW

    if needs_mask:
        pred3 = jnp.pad(pred3, ((0, 0), (0, 0), (0, hw_pad - HW)))
        true3 = jnp.pad(true3, ((0, 0), (0, 0), (0, hw_pad - HW)))
    pred4 = pred3.reshape(N, C, rows_pad, 128)
    true4 = true3.reshape(N, C, rows_pad, 128)

    grid = (N, rows_pad // t_sub)

    kernel = functools.partial(_focal_loss_kernel, gamma=gamma, alpha=alpha,
                               hw_valid=HW, t_sub=t_sub, needs_mask=needs_mask)
    ce_part, foc_part = pl.pallas_call(
        kernel,
        out_shape=(jax.ShapeDtypeStruct((N, 8, 128), jnp.float32),
                   jax.ShapeDtypeStruct((N, 8, 128), jnp.float32)),
        grid_spec=pltpu.PrefetchScalarGridSpec(
            num_scalar_prefetch=0,
            grid=grid,
            in_specs=[pl.BlockSpec((1, C, t_sub, 128), lambda n, j: (n, 0, j, 0)),
                      pl.BlockSpec((1, C, t_sub, 128), lambda n, j: (n, 0, j, 0))],
            out_specs=[pl.BlockSpec((1, 8, 128), lambda n, j: (n, 0, 0)),
                       pl.BlockSpec((1, 8, 128), lambda n, j: (n, 0, 0))],
        ),
        compiler_params=pltpu.CompilerParams(
            # batch axis parallel (2 TCs on v7x), spatial axis is the reduction
            dimension_semantics=("parallel", "arbitrary")),
    )(pred4, true4)

    # Tiny finalize in the wrapper: single cross-lane reduce over (N, 8, 128).
    ce_loss = jnp.sum(ce_part) / (N * HW)            # CE mean over N*H*W pixels
    focal_mean = jnp.sum(foc_part) / (N * C * HW)    # mean over all N*C*H*W elems
    return -focal_mean * ce_loss                     # mean(-alpha_f * mod * ce)


def _ref_focal_loss(pred, true, gamma=2, alpha=0.25):
    """Pure-JAX reference mirroring the PyTorch module exactly."""
    logp = jax.nn.log_softmax(pred, axis=1)
    ce_loss = jnp.mean(jnp.sum(-true * logp, axis=1))          # CE, prob targets, mean
    alpha_f = true * alpha + (1.0 - true) * (1.0 - alpha)
    mod = jnp.abs(true - logp) ** gamma
    return jnp.mean(-1.0 * alpha_f * mod * ce_loss)


if __name__ == "__main__":
    key = jax.random.PRNGKey(0)
    k1, k2 = jax.random.split(key)
    N, C, H, W = 2, 4, 16, 16
    pred = jax.random.normal(k1, (N, C, H, W), dtype=jnp.float32)
    true = jax.random.uniform(k2, (N, C, H, W), dtype=jnp.float32)  # soft prob targets

    loss = focal_loss(pred, true, gamma=2, alpha=0.25)
    loss = jax.block_until_ready(loss)

    ref = _ref_focal_loss(pred, true, gamma=2, alpha=0.25)
    assert jnp.allclose(loss, ref, rtol=1e-5, atol=1e-6), (loss, ref)
    print("KERNEL_OK")
</pallas_src>

<mosaic_0001>
module attributes {stable_mosaic.version = 11 : i64} {
  func.func @_focal_loss_kernel(%arg0: i32, %arg1: i32, %arg2: memref<1x4x8x128xf32, #tpu.memory_space<vmem>>, %arg3: memref<1x4x8x128xf32, #tpu.memory_space<vmem>>, %arg4: memref<1x8x128xf32, #tpu.memory_space<vmem>>, %arg5: memref<1x8x128xf32, #tpu.memory_space<vmem>>) attributes {dimension_semantics = [#tpu.dimension_semantics<parallel>, #tpu.dimension_semantics<arbitrary>], iteration_bounds = array<i64: 2, 1>, scalar_prefetch = 0 : i64, scratch_operands = 0 : i64, tpu.core_type = #tpu.core_type<tc>, window_params = [{transform_indices = @transform_0, window_bounds = array<i64: 1, 4, 8, 128>}, {transform_indices = @transform_1, window_bounds = array<i64: 1, 4, 8, 128>}, {transform_indices = @transform_2, window_bounds = array<i64: 1, 8, 128>}, {transform_indices = @transform_3, window_bounds = array<i64: 1, 8, 128>}]} {
    %c0_i32 = arith.constant 0 : i32
    %0 = arith.cmpi eq, %arg1, %c0_i32 : i32
    %1 = arith.extui %0 : i1 to i32
    %c0_i32_0 = arith.constant 0 : i32
    %2 = arith.cmpi ne, %1, %c0_i32_0 : i32
    scf.if %2 {
      %cst_31 = arith.constant 0.000000e+00 : f32
      %58 = vector.broadcast %cst_31 : f32 to vector<1x8x128xf32>
      %c0_32 = arith.constant 0 : index
      %c0_33 = arith.constant 0 : index
      %c0_34 = arith.constant 0 : index
      %59 = vector.load %arg4[%c0_32, %c0_33, %c0_34] : memref<1x8x128xf32, #tpu.memory_space<vmem>>, vector<1x8x128xf32>
      tpu.vector_store %arg4[%c0_32, %c0_33, %c0_34], %58 {strides = array<i32>} : memref<1x8x128xf32, #tpu.memory_space<vmem>>, vector<1x8x128xf32>,
      %cst_35 = arith.constant 0.000000e+00 : f32
      %60 = vector.broadcast %cst_35 : f32 to vector<1x8x128xf32>
      %c0_36 = arith.constant 0 : index
      %c0_37 = arith.constant 0 : index
      %c0_38 = arith.constant 0 : index
      %61 = vector.load %arg5[%c0_36, %c0_37, %c0_38] : memref<1x8x128xf32, #tpu.memory_space<vmem>>, vector<1x8x128xf32>
      tpu.vector_store %arg5[%c0_36, %c0_37, %c0_38], %60 {strides = array<i32>} : memref<1x8x128xf32, #tpu.memory_space<vmem>>, vector<1x8x128xf32>,
    } else {
    }
    %c0 = arith.constant 0 : index
    %c0_1 = arith.constant 0 : index
    %c0_2 = arith.constant 0 : index
    %c0_3 = arith.constant 0 : index
    %3 = vector.load %arg2[%c0, %c0_1, %c0_2, %c0_3] : memref<1x4x8x128xf32, #tpu.memory_space<vmem>>, vector<1x4x8x128xf32>
    %4 = vector.shape_cast %3 : vector<1x4x8x128xf32> to vector<4x8x128xf32>
    %c0_4 = arith.constant 0 : index
    %c0_5 = arith.constant 0 : index
    %c0_6 = arith.constant 0 : index
    %c0_7 = arith.constant 0 : index
    %5 = vector.load %arg3[%c0_4, %c0_5, %c0_6, %c0_7] : memref<1x4x8x128xf32, #tpu.memory_space<vmem>>, vector<1x4x8x128xf32>
    %6 = vector.shape_cast %5 : vector<1x4x8x128xf32> to vector<4x8x128xf32>
    %cst = arith.constant dense<0xFF800000> : vector<8x128xf32>
    %7 = vector.multi_reduction <maximumf>, %4, %cst [0] : vector<4x8x128xf32> to vector<8x128xf32>
    %8 = vector.shape_cast %7 : vector<8x128xf32> to vector<1x8x128xf32>
    %9 = vector.broadcast %8 : vector<1x8x128xf32> to vector<4x8x128xf32>
    %10 = arith.subf %4, %9 : vector<4x8x128xf32>
    %11 = math.exp %10 : vector<4x8x128xf32>
    %cst_8 = arith.constant dense<0.000000e+00> : vector<8x128xf32>
    %12 = vector.multi_reduction <add>, %11, %cst_8 [0] : vector<4x8x128xf32> to vector<8x128xf32>
    %13 = vector.shape_cast %12 : vector<8x128xf32> to vector<1x8x128xf32>
    %14 = math.log %13 : vector<1x8x128xf32>
    %15 = arith.addf %14, %8 : vector<1x8x128xf32>
    %16 = vector.broadcast %15 : vector<1x8x128xf32> to vector<4x8x128xf32>
    %17 = arith.subf %4, %16 : vector<4x8x128xf32>
    %cst_9 = arith.constant 0.000000e+00 : f32
    %18 = vector.broadcast %cst_9 : f32 to vector<4x8x128xf32>
    %19 = arith.subf %18, %6 : vector<4x8x128xf32>
    %20 = arith.mulf %19, %17 : vector<4x8x128xf32>
    %cst_10 = arith.constant dense<0.000000e+00> : vector<8x128xf32>
    %21 = vector.multi_reduction <add>, %20, %cst_10 [0] : vector<4x8x128xf32> to vector<8x128xf32>
    %cst_11 = arith.constant 2.500000e-01 : f32
    %22 = vector.broadcast %cst_11 : f32 to vector<4x8x128xf32>
    %23 = arith.mulf %6, %22 : vector<4x8x128xf32>
    %cst_12 = arith.constant 1.000000e+00 : f32
    %24 = vector.broadcast %cst_12 : f32 to vector<4x8x128xf32>
    %25 = arith.subf %24, %6 : vector<4x8x128xf32>
    %cst_13 = arith.constant 7.500000e-01 : f32
    %26 = vector.broadcast %cst_13 : f32 to vector<4x8x128xf32>
    %27 = arith.mulf %25, %26 : vector<4x8x128xf32>
    %28 = arith.addf %23, %27 : vector<4x8x128xf32>
    %29 = arith.subf %6, %17 : vector<4x8x128xf32>
    %30 = math.absf %29 : vector<4x8x128xf32>
    %31 = arith.mulf %30, %30 : vector<4x8x128xf32>
    %32 = arith.mulf %28, %31 : vector<4x8x128xf32>
    %cst_14 = arith.constant dense<0.000000e+00> : vector<8x128xf32>
    %33 = vector.multi_reduction <add>, %32, %cst_14 [0] : vector<4x8x128xf32> to vector<8x128xf32>
    %c1024_i32 = arith.constant 1024 : i32
    %34 = arith.muli %arg1, %c1024_i32 : i32
    %35 = tpu.iota {dimensions = array<i32: 0>} : vector<8x128xi32>
    %c128_i32 = arith.constant 128 : i32
    %36 = vector.broadcast %c128_i32 : i32 to vector<8x128xi32>
    %37 = arith.muli %35, %36 : vector<8x128xi32>
    %38 = vector.broadcast %34 : i32 to vector<8x128xi32>
    %39 = arith.addi %38, %37 : vector<8x128xi32>
    %40 = tpu.iota {dimensions = array<i32: 1>} : vector<8x128xi32>
    %41 = arith.addi %39, %40 : vector<8x128xi32>
    %c256_i32 = arith.constant 256 : i32
    %42 = vector.broadcast %c256_i32 : i32 to vector<8x128xi32>
    %43 = arith.cmpi slt, %41, %42 : vector<8x128xi32>
    %cst_15 = arith.constant 0.000000e+00 : f32
    %44 = vector.broadcast %cst_15 : f32 to vector<8x128xf32>
    %45 = arith.select %43, %21, %44 : vector<8x128xi1>, vector<8x128xf32>
    %cst_16 = arith.constant 0.000000e+00 : f32
    %46 = vector.broadcast %cst_16 : f32 to vector<8x128xf32>
    %47 = arith.select %43, %33, %46 : vector<8x128xi1>, vector<8x128xf32>
    %c0_17 = arith.constant 0 : index
    %c0_18 = arith.constant 0 : index
    %c0_19 = arith.constant 0 : index
    %48 = vector.load %arg4[%c0_17, %c0_18, %c0_19] : memref<1x8x128xf32, #tpu.memory_space<vmem>>, vector<1x8x128xf32>
    %49 = vector.shape_cast %45 : vector<8x128xf32> to vector<1x1x8x128xf32>
    %cst_20 = arith.constant dense<0.000000e+00> : vector<1x8x128xf32>
    %50 = vector.multi_reduction <add>, %49, %cst_20 [1] : vector<1x1x8x128xf32> to vector<1x8x128xf32>
    %51 = arith.addf %48, %50 : vector<1x8x128xf32>
    %c0_21 = arith.constant 0 : index
    %c0_22 = arith.constant 0 : index
    %c0_23 = arith.constant 0 : index
    %52 = vector.load %arg4[%c0_21, %c0_22, %c0_23] : memref<1x8x128xf32, #tpu.memory_space<vmem>>, vector<1x8x128xf32>
    tpu.vector_store %arg4[%c0_21, %c0_22, %c0_23], %51 {strides = array<i32>} : memref<1x8x128xf32, #tpu.memory_space<vmem>>, vector<1x8x128xf32>,
    %c0_24 = arith.constant 0 : index
    %c0_25 = arith.constant 0 : index
    %c0_26 = arith.constant 0 : index
    %53 = vector.load %arg5[%c0_24, %c0_25, %c0_26] : memref<1x8x128xf32, #tpu.memory_space<vmem>>, vector<1x8x128xf32>
    %54 = vector.shape_cast %47 : vector<8x128xf32> to vector<1x1x8x128xf32>
    %cst_27 = arith.constant dense<0.000000e+00> : vector<1x8x128xf32>
    %55 = vector.multi_reduction <add>, %54, %cst_27 [1] : vector<1x1x8x128xf32> to vector<1x8x128xf32>
    %56 = arith.addf %53, %55 : vector<1x8x128xf32>
    %c0_28 = arith.constant 0 : index
    %c0_29 = arith.constant 0 : index
    %c0_30 = arith.constant 0 : index
    %57 = vector.load %arg5[%c0_28, %c0_29, %c0_30] : memref<1x8x128xf32, #tpu.memory_space<vmem>>, vector<1x8x128xf32>
    tpu.vector_store %arg5[%c0_28, %c0_29, %c0_30], %56 {strides = array<i32>} : memref<1x8x128xf32, #tpu.memory_space<vmem>>, vector<1x8x128xf32>,
    return
  }
  func.func @transform_0(%arg0: i32, %arg1: i32) -> (i32, i32, i32, i32) {
    %c0_i32 = arith.constant 0 : i32
    %c0_i32_0 = arith.constant 0 : i32
    %c0_i32_1 = arith.constant 0 : i32
    return %arg0, %c0_i32, %arg1, %c0_i32_0 : i32, i32, i32, i32
  }
  func.func @transform_1(%arg0: i32, %arg1: i32) -> (i32, i32, i32, i32) {
    %c0_i32 = arith.constant 0 : i32
    %c0_i32_0 = arith.constant 0 : i32
    %c0_i32_1 = arith.constant 0 : i32
    return %arg0, %c0_i32, %arg1, %c0_i32_0 : i32, i32, i32, i32
  }
  func.func @transform_2(%arg0: i32, %arg1: i32) -> (i32, i32, i32) {
    %c0_i32 = arith.constant 0 : i32
    %c0_i32_0 = arith.constant 0 : i32
    %c0_i32_1 = arith.constant 0 : i32
    return %arg0, %c0_i32, %c0_i32_0 : i32, i32, i32
  }
  func.func @transform_3(%arg0: i32, %arg1: i32) -> (i32, i32, i32) {
    %c0_i32 = arith.constant 0 : i32
    %c0_i32_0 = arith.constant 0 : i32
    %c0_i32_1 = arith.constant 0 : i32
    return %arg0, %c0_i32, %c0_i32_0 : i32, i32, i32
  }
}

</mosaic_0001>

<llo_original>
// kernel: tpu_custom_call.1
$region0: #{tpu_custom_call.1}
  #allocation0 [shape = 'u32[]', space=smem, size = 0x4, offset = 0x4, fixed_abs, tag = 'smem constant byte address 0x4 - core index']
  #allocation1 [shape = 'u32[144,128]{1,0:T(1,128)}', space=vmem, size = 0x12000, scoped, tag = 'internal scratch']
  %s0 = inlined_call_operand.hbm [shape: f32[2,4,8,128], index: 0, kind: input, shape index: {}]
  %s1 = inlined_call_operand.hbm [shape: f32[2,4,8,128], index: 1, kind: input, shape index: {}]
  %s2 = inlined_call_operand.hbm [shape: f32[2,8,128], index: 2, kind: output, shape index: {0}]
  %s3 = inlined_call_operand.hbm [shape: f32[2,8,128], index: 3, kind: output, shape index: {1}]
  %4 = xla_tuple %s2, %s3
  %s5 = sld [smem:[#allocation0]]
  $region61: #{tpu_custom_call.1} parent=0
    _
  %s7 = ssub.s32 1, %s5
  %s8 = scalar_select 0, %s7, %s5
  $region1: #{tpu_custom_call.1} parent=0
    #allocation2 [shape = 'u8[32768]{0}', space=vmem, size = 0x8000, scoped, tag = 'input window, operand 0']
    #allocation3 [shape = 's32[2]{0}', space=sflag, size = 0x8, scoped, tag = 'scoped memory for tpu_custom_call.1']
    #allocation4 [shape = 's32[2]{0}', space=sflag, size = 0x8, scoped, tag = 'scoped memory for tpu_custom_call.1']
    #allocation5 [shape = 'u8[32768]{0}', space=vmem, size = 0x8000, scoped, tag = 'input window, operand 1']
    #allocation6 [shape = 's32[2]{0}', space=sflag, size = 0x8, scoped, tag = 'scoped memory for tpu_custom_call.1']
    #allocation7 [shape = 'u8[8192]{0}', space=vmem, size = 0x2000, scoped, tag = 'output window, operand 0']
    #allocation8 [shape = 'u8[8192]{0}', space=vmem, size = 0x2000, scoped, tag = 'output window, operand 1']
    #allocation9 [shape = 's32[2]{0}', space=sflag, size = 0x8, scoped, tag = 'scoped memory for tpu_custom_call.1']
    %9 = vsyncpa [#allocation3], 0
    %s10 = scalar_lea.sflag [#allocation3], 1
    %11 = vsyncpa %s10, 0
    %12 = vsyncpa [#allocation6], 0
    %s13 = scalar_lea.sflag [#allocation6], 1
    %14 = vsyncpa %s13, 0
    %15 = vsyncpa [#allocation4], 0
    %s16 = scalar_lea.sflag [#allocation4], 1
    %17 = vsyncpa %s16, 0
    %18 = vsyncpa [#allocation9], 0
    %s19 = scalar_lea.sflag [#allocation9], 1
    %20 = vsyncpa %s19, 0
    loop: start=0, step=1, limit=4
    $region2: #{tpu_custom_call.1} parent=1 // loop_pre_header
      _
    $region3: #{tpu_custom_call.1} parent=1 // loop_header
      %s22 = sphi 0, %s26
      %p23 = scmp.ge.s32.totalorder %s22, 4
      %s29 = sphi 0, %s41
      %s30 = sphi 0, %s37
      %s31 = sphi 0, %s29
      %s32 = sphi 0, %s30
      %s33 = sphi 0, %s31
      %s34 = sphi 0, %s32
      %s46 = sphi 0, %s48
      %s49 = sphi 0, %s46
      %s50 = sphi 0, %s49
      %s66 = sphi 0, %s50
      %s74 = sphi 0, %s76
      %s77 = sphi 0, %s74
      %s78 = sphi 0, %s77
      %s94 = sphi 0, %s78
      %s100 = sphi 0, %s102
      %s103 = sphi 0, %s100
      %s104 = sphi 0, %s103
      %s120 = sphi 0, %s104
      %s126 = sphi 0, %s128
      %s129 = sphi 0, %s126
      %s130 = sphi 0, %s129
      %s146 = sphi 0, %s130
    $region4: #{tpu_custom_call.1} parent=1 // loop_header_branch
      %25 = sbr.rel (%p23) target = $region8
    $region5: #{tpu_custom_call.1} parent=1 // loop_body
      %s27 = ssub.s32 %s22, 1
      %s28 = ssub.s32 %s22, 2
      %s35 = sadd.s32 1, %s30
      %p36 = scmp.ge.s32.totalorder %s35, 1
      %s37 = scalar_select %p36, 0, %s35
      %s38 = sadd.s32 1, %s29
      %s39 = scalar_select %p36, %s38, %s29
      %p40 = scmp.ge.s32.totalorder %s39, 2
      %s41 = scalar_select %p40, 0, %s39
      %s42 = ssub.s32 %s29, %s41
      %s43 = ssub.s32 %s30, %s37
      %s44 = sor.u32 %s42, %s43
      %p45 = scmp.eq.s32.totalorder %s44, 0
      %s47 = sadd.s32 %s46, 1
      %s48 = scalar_select %p45, %s46, %s47
      %p51 = pneg %p45
      %p52 = scmp.eq.s32.totalorder %s22, 1
      %p53 = por %p51, %p52
      %p54 = scmp.ne.s32.totalorder %s46, %s49
      %p55 = scmp.eq.s32.totalorder %s22, 0
      %p56 = por %p54, %p55
      %p57 = scmp.ne.s32.totalorder %s46, %s49
      %p58 = scmp.eq.s32.totalorder %s27, 1
      %p59 = por %p57, %p58
      %p60 = scmp.ne.s32.totalorder %s49, %s50
      %p61 = scmp.eq.s32.totalorder %s27, 0
      %p62 = por %p60, %p61
      %p63 = scmp.ne.s32.totalorder %s49, %s50
      %p64 = scmp.eq.s32.totalorder %s28, 1
      %p65 = por %p63, %p64
      %p67 = scmp.ne.s32.totalorder %s50, %s66
      %p68 = scmp.eq.s32.totalorder %s28, 0
      %p69 = por %p67, %p68
      %s70 = ssub.s32 %s29, %s41
      %s71 = ssub.s32 %s30, %s37
      %s72 = sor.u32 %s70, %s71
      %p73 = scmp.eq.s32.totalorder %s72, 0
      %s75 = sadd.s32 %s74, 1
      %s76 = scalar_select %p73, %s74, %s75
      %p79 = pneg %p73
      %p80 = scmp.eq.s32.totalorder %s22, 1
      %p81 = por %p79, %p80
      %p82 = scmp.ne.s32.totalorder %s74, %s77
      %p83 = scmp.eq.s32.totalorder %s22, 0
      %p84 = por %p82, %p83
      %p85 = scmp.ne.s32.totalorder %s74, %s77
      %p86 = scmp.eq.s32.totalorder %s27, 1
      %p87 = por %p85, %p86
      %p88 = scmp.ne.s32.totalorder %s77, %s78
      %p89 = scmp.eq.s32.totalorder %s27, 0
      %p90 = por %p88, %p89
      %p91 = scmp.ne.s32.totalorder %s77, %s78
      %p92 = scmp.eq.s32.totalorder %s28, 1
      %p93 = por %p91, %p92
      %p95 = scmp.ne.s32.totalorder %s78, %s94
      %p96 = scmp.eq.s32.totalorder %s28, 0
      %p97 = por %p95, %p96
      %s98 = ssub.s32 %s29, %s41
      %p99 = scmp.eq.s32.totalorder %s98, 0
      %s101 = sadd.s32 %s100, 1
      %s102 = scalar_select %p99, %s100, %s101
      %p105 = pneg %p99
      %p106 = scmp.eq.s32.totalorder %s22, 1
      %p107 = por %p105, %p106
      %p108 = scmp.ne.s32.totalorder %s100, %s103
      %p109 = scmp.eq.s32.totalorder %s22, 0
      %p110 = por %p108, %p109
      %p111 = scmp.ne.s32.totalorder %s100, %s103
      %p112 = scmp.eq.s32.totalorder %s27, 1
      %p113 = por %p111, %p112
      %p114 = scmp.ne.s32.totalorder %s103, %s104
      %p115 = scmp.eq.s32.totalorder %s27, 0
      %p116 = por %p114, %p115
      %p117 = scmp.ne.s32.totalorder %s103, %s104
      %p118 = scmp.eq.s32.totalorder %s28, 1
      %p119 = por %p117, %p118
      %p121 = scmp.ne.s32.totalorder %s104, %s120
      %p122 = scmp.eq.s32.totalorder %s28, 0
      %p123 = por %p121, %p122
      %s124 = ssub.s32 %s29, %s41
      %p125 = scmp.eq.s32.totalorder %s124, 0
      %s127 = sadd.s32 %s126, 1
      %s128 = scalar_select %p125, %s126, %s127
      %p131 = pneg %p125
      %p132 = scmp.eq.s32.totalorder %s22, 1
      %p133 = por %p131, %p132
      %p134 = scmp.ne.s32.totalorder %s126, %s129
      %p135 = scmp.eq.s32.totalorder %s22, 0
      %p136 = por %p134, %p135
      %p137 = scmp.ne.s32.totalorder %s126, %s129
      %p138 = scmp.eq.s32.totalorder %s27, 1
      %p139 = por %p137, %p138
      %p140 = scmp.ne.s32.totalorder %s129, %s130
      %p141 = scmp.eq.s32.totalorder %s27, 0
      %p142 = por %p140, %p141
      %p143 = scmp.ne.s32.totalorder %s129, %s130
      %p144 = scmp.eq.s32.totalorder %s28, 1
      %p145 = por %p143, %p144
      %p147 = scmp.ne.s32.totalorder %s130, %s146
      %p148 = scmp.eq.s32.totalorder %s28, 0
      %p149 = por %p147, %p148
      %p150 = scmp.le.s32.totalorder 1, %s22
      %p151 = scmp.lt.s32.totalorder %s22, 3
      %p152 = pnand %p150, %p151
      %p153 = pneg %p152
      // Predicated region
      $region9: #{tpu_custom_call.1} parent=5 // pred_check
        _
      $region10: #{tpu_custom_call.1} parent=5 // pred_check_branch
        %155 = sbr.rel (%p152) target = $region12
      $region11: #{tpu_custom_call.1} parent=5 // pred_region
        %s156 = ssub.s32 %s22, 1
      $region12: #{tpu_custom_call.1} parent=5 // pred_fallthru
        _
      %p157 = scmp.lt.s32.totalorder %s22, 2
      // Predicated region
      $region13: #{tpu_custom_call.1} parent=5 // pred_check
        %p158 = pneg %p157
      $region14: #{tpu_custom_call.1} parent=5 // pred_check_branch
        %160 = sbr.rel (%p158) target = $region16
      $region15: #{tpu_custom_call.1} parent=5 // pred_region
        // Predicated region
        $region17: #{tpu_custom_call.1} parent=15 // pred_check
          %p161 = pneg %p56
        $region18: #{tpu_custom_call.1} parent=15 // pred_check_branch
          %163 = sbr.rel (%p161) target = $region20
        $region19: #{tpu_custom_call.1} parent=15 // pred_region
          %s164 = sand.u32 %s46, 1
          %s165 = scalar_lea.sflag [#allocation3], %s164
          %s166 = sand.u32 %s46, 1
          %s167 = smul.addr %s166, 32
          %s168 = scalar_lea.vmem [#allocation2], %s167
          %s170 = ssub.s32 512, 512
          %171 = vsyncadd %s165, %s170
          %s172 = smul.addr %s29, 4
          %s173 = sadd.s32 %s30, %s172
          %s174 = smul.addr %s173, 128
          %s175 = scalar_lea.hbm %s0, %s174
          %s176 = sshll.u32 %s168, 4
          %s177 = int_to_ptr.vmem [resolvable:$true] %s176
          %182 = dma.hbm_to_vmem [thread:$0]  %s175, 512, %s177, %s165, 128, 128, 8
        $region20: #{tpu_custom_call.1} parent=15 // pred_fallthru
          _
        // Predicated region
        $region21: #{tpu_custom_call.1} parent=15 // pred_check
          %p183 = pneg %p84
        $region22: #{tpu_custom_call.1} parent=15 // pred_check_branch
          %185 = sbr.rel (%p183) target = $region24
        $region23: #{tpu_custom_call.1} parent=15 // pred_region
          %s186 = sand.u32 %s74, 1
          %s187 = scalar_lea.sflag [#allocation6], %s186
          %s188 = sand.u32 %s74, 1
          %s189 = smul.addr %s188, 32
          %s190 = scalar_lea.vmem [#allocation5], %s189
          %s192 = ssub.s32 512, 512
          %193 = vsyncadd %s187, %s192
          %s194 = smul.addr %s29, 4
          %s195 = sadd.s32 %s30, %s194
          %s196 = smul.addr %s195, 128
          %s197 = scalar_lea.hbm %s1, %s196
          %s198 = sshll.u32 %s190, 4
          %s199 = int_to_ptr.vmem [resolvable:$true] %s198
          %204 = dma.hbm_to_vmem [thread:$0]  %s197, 512, %s199, %s187, 128, 128, 8
        $region24: #{tpu_custom_call.1} parent=15 // pred_fallthru
          _
      $region16: #{tpu_custom_call.1} parent=5 // pred_fallthru
        _
      %p205 = scmp.le.s32.totalorder 1, %s22
      %p206 = scmp.lt.s32.totalorder %s22, 3
      %p207 = pnand %p205, %p206
      %p208 = pneg %p207
      // Predicated region
      $region25: #{tpu_custom_call.1} parent=5 // pred_check
        _
      $region26: #{tpu_custom_call.1} parent=5 // pred_check_branch
        %210 = sbr.rel (%p207) target = $region28
      $region27: #{tpu_custom_call.1} parent=5 // pred_region
        %s211 = ssub.s32 %s22, 1
        %s212 = sand.u32 %s49, 1
        %s213 = scalar_lea.sflag [#allocation3], %s212
        %s214 = sand.u32 %s49, 1
        %s215 = smul.addr %s214, 32
        %s216 = scalar_lea.vmem [#allocation2], %s215
        // Predicated region
        $region29: #{tpu_custom_call.1} parent=27 // pred_check
          %p217 = pneg %p62
        $region30: #{tpu_custom_call.1} parent=27 // pred_check_branch
          %219 = sbr.rel (%p217) target = $region32
        $region31: #{tpu_custom_call.1} parent=27 // pred_region
          %220 = dma.done %s213, 512
        $region32: #{tpu_custom_call.1} parent=27 // pred_fallthru
          _
        %s221 = sand.u32 %s77, 1
        %s222 = scalar_lea.sflag [#allocation6], %s221
        %s223 = sand.u32 %s77, 1
        %s224 = smul.addr %s223, 32
        %s225 = scalar_lea.vmem [#allocation5], %s224
        // Predicated region
        $region33: #{tpu_custom_call.1} parent=27 // pred_check
          %p226 = pneg %p90
        $region34: #{tpu_custom_call.1} parent=27 // pred_check_branch
          %228 = sbr.rel (%p226) target = $region36
        $region35: #{tpu_custom_call.1} parent=27 // pred_region
          %229 = dma.done %s222, 512
        $region36: #{tpu_custom_call.1} parent=27 // pred_fallthru
          _
        %s230 = sand.u32 %s49, 1
        %s231 = scalar_lea.sflag [#allocation3], %s230
        %s232 = sand.u32 %s49, 1
        %s233 = smul.addr %s232, 32
        %s234 = scalar_lea.vmem [#allocation2], %s233
        %p235 = pneg %p62
        %p236 = pneg %p59
        %s237 = sand.u32 %s77, 1
        %s238 = scalar_lea.sflag [#allocation6], %s237
        %s239 = sand.u32 %s77, 1
        %s240 = smul.addr %s239, 32
        %s241 = scalar_lea.vmem [#allocation5], %s240
        %p242 = pneg %p90
        %p243 = pneg %p87
        %p244 = pneg %p116
        %p245 = pneg %p113
        %s246 = sand.u32 %s103, 1
        %s247 = scalar_lea.sflag [#allocation4], %s246
        %s248 = sand.u32 %s103, 1
        %s249 = smul.addr %s248, 8
        %s250 = scalar_lea.vmem [#allocation7], %s249
        %p251 = pneg %p142
        %p252 = pneg %p139
        %s253 = sand.u32 %s129, 1
        %s254 = scalar_lea.sflag [#allocation9], %s253
        %s255 = sand.u32 %s129, 1
        %s256 = smul.addr %s255, 8
        %s257 = scalar_lea.vmem [#allocation8], %s256
        %p258 = scmp.eq.s32.totalorder %s32, 0
        // Predicated region
        $region37: #{tpu_custom_call.1} parent=27 // pred_check
          %p259 = pneg %p258
        $region38: #{tpu_custom_call.1} parent=27 // pred_check_branch
          %261 = sbr.rel (%p259) target = $region40
        $region39: #{tpu_custom_call.1} parent=27 // pred_region
          %262 = vst [vmem:[%s250] sm:$0xff] 0.0
          %263 = vst [vmem:[%s257] sm:$0xff] 0.0
        $region40: #{tpu_custom_call.1} parent=27 // pred_fallthru
          _
        %v264 = vld [vmem:[%s216] sm:$0xff]
        %v265 = vld [vmem:[%s216 + $0x8] sm:$0xff]
        %v266 = vld [vmem:[%s216 + $0x10] sm:$0xff]
        %v267 = vld [vmem:[%s216 + $0x18] sm:$0xff]
        %v268 = vld [vmem:[%s225] sm:$0xff]
        %v269 = vld [vmem:[%s225 + $0x8] sm:$0xff]
        %v270 = vld [vmem:[%s225 + $0x10] sm:$0xff]
        %v271 = vld [vmem:[%s225 + $0x18] sm:$0xff]
        %v272 = vmax.f32 %v264, %v265
        %v273 = vmax.f32 %v266, %v267
        %v274 = vmax.f32 %v272, %v273
        %v275 = vsub.f32 %v264, %v274
        %v276 = vsub.f32 %v265, %v274
        %v277 = vsub.f32 %v266, %v274
        %v278 = vsub.f32 %v267, %v274
        %v279 = vmul.f32 %v275, 1.442695
        %v280 = vpow.pop %v279
        %v281 = vmul.f32 %v276, 1.442695
        %v282 = vpow.pop %v281
        %v283 = vmul.f32 %v277, 1.442695
        %v284 = vpow.pop %v283
        %v285 = vmul.f32 %v278, 1.442695
        %v286 = vpow.pop %v285
        %v287 = vadd.f32 %v280, %v282
        %v288 = vadd.f32 %v287, %v284
        %v289 = vadd.f32 %v288, %v286
        %v290 = vlog2.pop %v289
        %v291 = vmul.f32 %v290, 0.6931472
        %v292 = vadd.f32 %v291, %v274
        %v293 = vsub.f32 %v264, %v292
        %v294 = vsub.f32 %v265, %v292
        %v295 = vsub.f32 %v266, %v292
        %v296 = vsub.f32 %v267, %v292
        %v297 = vsub.f32 0.0, %v268
        %v298 = vsub.f32 0.0, %v269
        %v299 = vsub.f32 0.0, %v270
        %v300 = vsub.f32 0.0, %v271
        %v301 = vmul.f32 %v297, %v293
        %v302 = vmul.f32 %v298, %v294
        %v303 = vmul.f32 %v299, %v295
        %v304 = vmul.f32 %v300, %v296
        %v305 = vadd.f32 %v301, %v302
        %v306 = vadd.f32 %v305, %v303
        %v307 = vadd.f32 %v306, %v304
        %v308 = vmul.f32 %v268, 0.25
        %v309 = vmul.f32 %v269, 0.25
        %v310 = vmul.f32 %v270, 0.25
        %v311 = vmul.f32 %v271, 0.25
        %v312 = vsub.f32 1.0, %v268
        %v313 = vsub.f32 1.0, %v269
        %v314 = vsub.f32 1.0, %v270
        %v315 = vsub.f32 1.0, %v271
        %v316 = vmul.f32 %v312, 0.75
        %v317 = vmul.f32 %v313, 0.75
        %v318 = vmul.f32 %v314, 0.75
        %v319 = vmul.f32 %v315, 0.75
        %v320 = vadd.f32 %v308, %v316
        %v321 = vadd.f32 %v309, %v317
        %v322 = vadd.f32 %v310, %v318
        %v323 = vadd.f32 %v311, %v319
        %v324 = vsub.f32 %v268, %v293
        %v325 = vsub.f32 %v269, %v294
        %v326 = vsub.f32 %v270, %v295
        %v327 = vsub.f32 %v271, %v296
        %v328 = vand.u32 2147483647, %v324
        %v329 = vand.u32 2147483647, %v325
        %v330 = vand.u32 2147483647, %v326
        %v331 = vand.u32 2147483647, %v327
        %v332 = vmul.f32 %v328, %v328
        %v333 = vmul.f32 %v329, %v329
        %v334 = vmul.f32 %v330, %v330
        %v335 = vmul.f32 %v331, %v331
        %v336 = vmul.f32 %v320, %v332
        %v337 = vmul.f32 %v321, %v333
        %v338 = vmul.f32 %v322, %v334
        %v339 = vmul.f32 %v323, %v335
        %v340 = vadd.f32 %v336, %v337
        %v341 = vadd.f32 %v340, %v338
        %v342 = vadd.f32 %v341, %v339
        %s343 = smul.u32 %s32, 1024
        %v344 = vlaneseq
        %v345 = vshrl.u32 %v344, 7
        %v346 = vmul.u32 %v345, 128
        %v347 = vstv %s343
        %v348 = vadd.s32 %v347, %v346
        %v349 = vlaneseq
        %v350 = vand.u32 %v349, 127
        %v351 = vadd.s32 %v348, %v350
        %vm352 = vcmp.lt.s32.totalorder %v351, 256
        %v353 = vsel %vm352, %v307, 0.0
        %v354 = vsel %vm352, %v342, 0.0
        %v355 = vld [vmem:[%s250] sm:$0xff]
        %v356 = vadd.f32 %v353, 0.0
        %v357 = vadd.f32 %v355, %v356
        %358 = vst [vmem:[%s250] sm:$0xff] %v357
        %v359 = vld [vmem:[%s257] sm:$0xff]
        %v360 = vadd.f32 %v354, 0.0
        %v361 = vadd.f32 %v359, %v360
        %362 = vst [vmem:[%s257] sm:$0xff] %v361
        %s363 = sand.u32 %s103, 1
        %s364 = scalar_lea.sflag [#allocation4], %s363
        %s365 = sand.u32 %s103, 1
        %s366 = smul.addr %s365, 8
        %s367 = scalar_lea.vmem [#allocation7], %s366
        %s368 = sand.u32 %s129, 1
        %s369 = scalar_lea.sflag [#allocation9], %s368
        %s370 = sand.u32 %s129, 1
        %s371 = smul.addr %s370, 8
        %s372 = scalar_lea.vmem [#allocation8], %s371
        // Predicated region
        $region41: #{tpu_custom_call.1} parent=27 // pred_check
          %p373 = pneg %p113
        $region42: #{tpu_custom_call.1} parent=27 // pred_check_branch
          %375 = sbr.rel (%p373) target = $region44
        $region43: #{tpu_custom_call.1} parent=27 // pred_region
          %s377 = ssub.s32 128, 128
          %378 = vsyncadd %s364, %s377
          %s379 = smul.addr %s31, 128
          %s380 = scalar_lea.hbm %s2, %s379
          %s382 = sshll.u32 %s367, 4
          %s383 = int_to_ptr.vmem [resolvable:$true] %s382
          %385 = dma.vmem_to_hbm [thread:$0]  %s383, 128, %s380, %s364
        $region44: #{tpu_custom_call.1} parent=27 // pred_fallthru
          _
        // Predicated region
        $region45: #{tpu_custom_call.1} parent=27 // pred_check
          %p386 = pneg %p139
        $region46: #{tpu_custom_call.1} parent=27 // pred_check_branch
          %388 = sbr.rel (%p386) target = $region48
        $region47: #{tpu_custom_call.1} parent=27 // pred_region
          %s390 = ssub.s32 128, 128
          %391 = vsyncadd %s369, %s390
          %s392 = smul.addr %s31, 128
          %s393 = scalar_lea.hbm %s3, %s392
          %s395 = sshll.u32 %s372, 4
          %s396 = int_to_ptr.vmem [resolvable:$true] %s395
          %398 = dma.vmem_to_hbm [thread:$0]  %s396, 128, %s393, %s369
        $region48: #{tpu_custom_call.1} parent=27 // pred_fallthru
          _
      $region28: #{tpu_custom_call.1} parent=5 // pred_fallthru
        _
      %p399 = scmp.le.s32.totalorder 2, %s22
      // Predicated region
      $region49: #{tpu_custom_call.1} parent=5 // pred_check
        %p400 = pneg %p399
      $region50: #{tpu_custom_call.1} parent=5 // pred_check_branch
        %402 = sbr.rel (%p400) target = $region52
      $region51: #{tpu_custom_call.1} parent=5 // pred_region
        %s403 = ssub.s32 %s22, 2
        // Predicated region
        $region53: #{tpu_custom_call.1} parent=51 // pred_check
          %p404 = pneg %p119
        $region54: #{tpu_custom_call.1} parent=51 // pred_check_branch
          %406 = sbr.rel (%p404) target = $region56
        $region55: #{tpu_custom_call.1} parent=51 // pred_region
          %s407 = sand.u32 %s104, 1
          %s408 = scalar_lea.sflag [#allocation4], %s407
          %s409 = sand.u32 %s104, 1
          %s410 = smul.addr %s409, 8
          %s411 = scalar_lea.vmem [#allocation7], %s410
          %412 = dma.done %s408, 128
        $region56: #{tpu_custom_call.1} parent=51 // pred_fallthru
          _
        // Predicated region
        $region57: #{tpu_custom_call.1} parent=51 // pred_check
          %p413 = pneg %p145
        $region58: #{tpu_custom_call.1} parent=51 // pred_check_branch
          %415 = sbr.rel (%p413) target = $region60
        $region59: #{tpu_custom_call.1} parent=51 // pred_region
          %s416 = sand.u32 %s130, 1
          %s417 = scalar_lea.sflag [#allocation9], %s416
          %s418 = sand.u32 %s130, 1
          %s419 = smul.addr %s418, 8
          %s420 = scalar_lea.vmem [#allocation8], %s419
          %421 = dma.done %s417, 128
        $region60: #{tpu_custom_call.1} parent=51 // pred_fallthru
          _
      $region52: #{tpu_custom_call.1} parent=5 // pred_fallthru
        _
    $region6: #{tpu_custom_call.1} parent=1 // loop_footer
      %s26 = sadd.s32 1, %s22
    $region7: #{tpu_custom_call.1} parent=1 // loop_footer_branch
      %21 = sbr.rel target = $region3
    $region8: #{tpu_custom_call.1} parent=1 // loop_exit
      _
    %422 = vsyncpa [#allocation3], 1
    %s423 = scalar_lea.sflag [#allocation3], 1
    %424 = vsyncpa %s423, 1
    %425 = vsyncpa [#allocation6], 1
    %s426 = scalar_lea.sflag [#allocation6], 1
    %427 = vsyncpa %s426, 1
    %428 = vsyncpa [#allocation4], 1
    %s429 = scalar_lea.sflag [#allocation4], 1
    %430 = vsyncpa %s429, 1
    %431 = vsyncpa [#allocation9], 1
    %s432 = scalar_lea.sflag [#allocation9], 1
    %433 = vsyncpa %s432, 1

</llo_original>
